<compile_context>
chip_gen: v6e
topology: v6e:2x2x1
jax: 0.10.0
libtpu: 0.0.40
codegen_flags: <defaults>
</compile_context>

<pallas_src>
import functools

import jax
import jax.numpy as jnp
from jax.experimental import pallas as pl
from jax.experimental.pallas import tpu as pltpu


# ----------------------------- small helpers --------------------------------
def _round_up(n, m):
    return ((n + m - 1) // m) * m


def _cdiv(a, b):
    return -(-a // b)


# ----------------------------- activations ----------------------------------
def _apply_activation(h, name):
    """Pure-jnp activations matching the PyTorch ACTIVATIONS map."""
    if name is None:
        return h
    if name == "relu":
        return jnp.maximum(h, 0.0)
    if name == "relu6":
        return jnp.clip(h, 0.0, 6.0)
    if name == "sigmoid":
        return 1.0 / (1.0 + jnp.exp(-h))
    if name == "elu":
        return jnp.where(h > 0.0, h, jnp.exp(h) - 1.0)
    if name == "leaky_relu":
        return jnp.where(h > 0.0, h, 0.01 * h)
    if name == "logsigmoid":
        # Numerically stable (matches F.logsigmoid): avoids exp(-h) overflow for h << 0.
        return jnp.where(h > 0.0, -jnp.log1p(jnp.exp(-h)), h - jnp.log1p(jnp.exp(h)))
    raise ValueError(f"unsupported activation: {name}")


# ------------------------------- kernel --------------------------------------
def _fused_fcnet_kernel(*refs, n_layers, out_pdims, activation):
    """refs = (x_ref, w0_ref, ..., w{L-1}_ref, bias_ref, o_ref).

    Hidden activations never touch HBM.  Accumulation is f32; matmul operands use
    the (prepared) weight dtype (f32 or bf16).  Padded class lanes of the last
    layer arrive at -1e30 via the baked bias, so log_softmax needs no masking.
    """
    x_ref = refs[0]
    w_refs = refs[1 : 1 + n_layers]
    b_ref = refs[1 + n_layers]
    o_ref = refs[2 + n_layers]

    h = x_ref[...].astype(jnp.float32)
    for i in range(n_layers):
        w = w_refs[i][...]
        pd = out_pdims[i]
        b = b_ref[pl.ds(i, 1), :pd]  # (1, pd) f32, broadcasts over batch rows
        h = jnp.dot(h.astype(w.dtype), w, preferred_element_type=jnp.float32) + b
        if activation is not None and i < n_layers - 1:
            h = _apply_activation(h, activation)

    # log_softmax over the full lane-dense tile; padded class lanes are ~-1e30 so
    # they never win the max and exp() underflows them to exactly 0.
    m = jnp.max(h, axis=-1, keepdims=True)
    e = jnp.exp(h - m)
    s = jnp.sum(e, axis=-1, keepdims=True)
    o_ref[...] = (h - (m + jnp.log(s))).astype(o_ref.dtype)


# --------------------------- one-time param prep ------------------------------
def prepare_fcnet_params(params, *, compute_dtype=jnp.float32, neg_pad=-1e30):
    """Pad/pack parameters ONCE (hoisted out of the per-call path).

    params: list of (w (Din, Dout), b (1, Dout)) in f32.
    Returns a dict with:
      weights : tuple of L padded weights, layer i has shape (pdims_in[i], pdims_out[i])
                in `compute_dtype`; padded rows/cols are 0.  First layer keeps its
                real input dim (x is passed unpadded).
      biases  : (L, Dmax) f32, one packed array; the LAST layer's padded class
                lanes hold `neg_pad` so the kernel's log_softmax needs no mask.
    """
    n_layers = len(params)
    dims_in = [w.shape[0] for (w, _) in params]
    dims_out = [w.shape[1] for (w, _) in params]
    pdims_out = [_round_up(d, 128) for d in dims_out]
    pdims_in = [dims_in[0]] + pdims_out[:-1]
    dmax = max(pdims_out)

    weights = []
    biases = jnp.zeros((n_layers, dmax), jnp.float32)
    for i, (w, b) in enumerate(params):
        wp = jnp.zeros((pdims_in[i], pdims_out[i]), jnp.float32)
        wp = wp.at[: dims_in[i], : dims_out[i]].set(w.astype(jnp.float32))
        weights.append(wp.astype(compute_dtype))
        biases = biases.at[i, : dims_out[i]].set(b.reshape(-1).astype(jnp.float32))
    if pdims_out[-1] > dims_out[-1]:
        biases = biases.at[-1, dims_out[-1] : pdims_out[-1]].set(neg_pad)

    return dict(
        weights=tuple(weights),
        biases=biases,
        n_layers=n_layers,
        dims_in=tuple(dims_in),
        dims_out=tuple(dims_out),
        pdims_in=tuple(pdims_in),
        pdims_out=tuple(pdims_out),
    )


# ------------------------------- forward --------------------------------------
def fcnet_forward(x, prep, activation="relu"):
    """x: (B, Din) — Din unpadded.  Returns the padded (Bp, pdims_out[-1]) log-softmax
    slab; valid entries are [:B, :prep['dims_out'][-1]].  Consumers that can read the
    slab directly avoid an extra full-output HBM copy."""
    B, Din = x.shape
    L = prep["n_layers"]
    pdims_in, pdims_out = prep["pdims_in"], prep["pdims_out"]
    assert Din == pdims_in[0], (Din, pdims_in[0])
    dmax = prep["biases"].shape[1]

    # Batch tiling: rows to a multiple of 8; >=2 grid steps when B >= 16 so the
    # "parallel" axis can split across v7x's 2 TensorCores; <=512-row tiles.
    B8 = _round_up(B, 8)
    n_tiles = max(2, _cdiv(B8, 512)) if B8 >= 16 else 1
    TB = _round_up(_cdiv(B8, n_tiles), 8)
    Bp = TB * n_tiles

    xf = x.astype(jnp.float32)
    if Bp != B:
        xf = jnp.pad(xf, ((0, Bp - B), (0, 0)))  # rows only; features stay unpadded

    in_specs = [pl.BlockSpec((TB, Din), lambda i: (i, 0))]
    for li in range(L):
        in_specs.append(pl.BlockSpec((pdims_in[li], pdims_out[li]), lambda i: (0, 0)))
    in_specs.append(pl.BlockSpec((L, dmax), lambda i: (0, 0)))
    out_specs = pl.BlockSpec((TB, pdims_out[-1]), lambda i: (i, 0))

    # Cost estimate (advisory, for XLA scheduling around the custom call).
    flops = 2 * Bp * sum(pdims_in[i] * pdims_out[i] for i in range(L))
    transcendentals = Bp * pdims_out[-1] + Bp
    w_bytes = sum(int(w.size) * w.dtype.itemsize for w in prep["weights"])
    b_bytes = int(prep["biases"].size) * 4
    bytes_accessed = 4 * Bp * Din + w_bytes + b_bytes + 4 * Bp * pdims_out[-1]

    # Explicit VMEM budget: double-buffered x/out tiles + resident params + headroom,
    # capped at v7x's 64 MiB physical VMEM.
    io_bytes = TB * (Din + pdims_out[-1]) * 4
    act_bytes = 4 * TB * max(pdims_out) * 4
    needed = 2 * io_bytes + 2 * (w_bytes + b_bytes) + act_bytes
    vmem_limit = int(min(64 << 20, max(2 * needed, 16 << 20)))

    out_p = pl.pallas_call(
        functools.partial(
            _fused_fcnet_kernel,
            n_layers=L,
            out_pdims=pdims_out,
            activation=activation,
        ),
        out_shape=jax.ShapeDtypeStruct((Bp, pdims_out[-1]), jnp.float32),
        grid=(Bp // TB,),
        in_specs=in_specs,
        out_specs=out_specs,
        compiler_params=pltpu.CompilerParams(
            dimension_semantics=("parallel",),  # batch axis: megacore-splittable
            vmem_limit_bytes=vmem_limit,
        ),
        cost_estimate=pl.CostEstimate(
            flops=flops,
            transcendentals=transcendentals,
            bytes_accessed=bytes_accessed,
        ),
    )(xf, *prep["weights"], prep["biases"])

    return out_p


# ------------------------------ reference ------------------------------------
def fcnet_ref(x, params, activation="relu"):
    h = x
    n = len(params)
    for i, (w, b) in enumerate(params):
        h = h @ w + b.reshape(1, -1)
        if activation is not None and i < n - 1:
            h = _apply_activation(h, activation)
    return jax.nn.log_softmax(h, axis=1)


# --------------------------------- init --------------------------------------
def init_fc_params(key, layer_sizes):
    """nn.Linear default init U(-1/sqrt(fan_in), 1/sqrt(fan_in)); weights stored (Din, Dout)."""
    params = []
    for i in range(len(layer_sizes) - 1):
        din, dout = layer_sizes[i], layer_sizes[i + 1]
        key, kw, kb = jax.random.split(key, 3)
        bound = 1.0 / (din ** 0.5)
        w = jax.random.uniform(kw, (din, dout), jnp.float32, -bound, bound)
        b = jax.random.uniform(kb, (1, dout), jnp.float32, -bound, bound)
        params.append((w, b))
    return params


if __name__ == "__main__":
    # FCNet(layer_sizes=(32, 64, 48, 16), activation='relu') -> log_softmax over 16 classes.
    layer_sizes = (32, 64, 48, 16)
    batch = 8
    n_classes = layer_sizes[-1]

    key = jax.random.PRNGKey(0)
    key, kx = jax.random.split(key)
    x = jax.random.normal(kx, (batch, layer_sizes[0]), jnp.float32)
    params = init_fc_params(key, layer_sizes)
    ref = fcnet_ref(x, params, activation="relu")

    # f32 MXU operands (default): matches the f32 reference to 1e-4.
    prep = prepare_fcnet_params(params)  # one-time padding/packing (hoisted)
    out_slab = jax.block_until_ready(fcnet_forward(x, prep, activation="relu"))
    out = out_slab[:batch, :n_classes]  # slice only for the correctness check
    assert out.shape == (batch, n_classes)
    err = float(jnp.max(jnp.abs(out - ref)))
    assert jnp.allclose(out, ref, atol=1e-4, rtol=1e-4), err

    # bf16 MXU operands, f32 accumulate (v6e/v7x throughput path): looser tolerance.
    prep_bf16 = prepare_fcnet_params(params, compute_dtype=jnp.bfloat16)
    out16 = jax.block_until_ready(fcnet_forward(x, prep_bf16, activation="relu"))
    err16 = float(jnp.max(jnp.abs(out16[:batch, :n_classes] - ref)))
    assert jnp.isfinite(err16) and err16 < 0.25, err16

    print("KERNEL_OK")
</pallas_src>

<mosaic_0001>
module attributes {stable_mosaic.version = 11 : i64} {
  func.func @_fused_fcnet_kernel(%arg0: i32, %arg1: memref<8x32xf32, #tpu.memory_space<vmem>>, %arg2: memref<32x128xf32, #tpu.memory_space<vmem>>, %arg3: memref<128x128xf32, #tpu.memory_space<vmem>>, %arg4: memref<128x128xf32, #tpu.memory_space<vmem>>, %arg5: memref<3x128xf32, #tpu.memory_space<vmem>>, %arg6: memref<8x128xf32, #tpu.memory_space<vmem>>) attributes {dimension_semantics = [#tpu.dimension_semantics<parallel>], iteration_bounds = array<i64: 1>, scalar_prefetch = 0 : i64, scratch_operands = 0 : i64, tpu.core_type = #tpu.core_type<tc>, window_params = [{transform_indices = @transform_0, window_bounds = array<i64: 8, 32>}, {pipeline_mode = #tpu.pipeline_mode<synchronous>, transform_indices = @transform_1, window_bounds = array<i64: 32, 128>}, {pipeline_mode = #tpu.pipeline_mode<synchronous>, transform_indices = @transform_2, window_bounds = array<i64: 128, 128>}, {pipeline_mode = #tpu.pipeline_mode<synchronous>, transform_indices = @transform_3, window_bounds = array<i64: 128, 128>}, {pipeline_mode = #tpu.pipeline_mode<synchronous>, transform_indices = @transform_4, window_bounds = array<i64: 3, 128>}, {transform_indices = @transform_5, window_bounds = array<i64: 8, 128>}]} {
    %c0 = arith.constant 0 : index
    %c0_0 = arith.constant 0 : index
    %0 = vector.load %arg1[%c0, %c0_0] : memref<8x32xf32, #tpu.memory_space<vmem>>, vector<8x32xf32>
    %c0_1 = arith.constant 0 : index
    %c0_2 = arith.constant 0 : index
    %1 = vector.load %arg2[%c0_1, %c0_2] : memref<32x128xf32, #tpu.memory_space<vmem>>, vector<32x128xf32>
    %c0_3 = arith.constant 0 : index
    %c0_4 = arith.constant 0 : index
    %2 = vector.load %arg5[%c0_3, %c0_4] : memref<3x128xf32, #tpu.memory_space<vmem>>, vector<1x128xf32>
    %cst = arith.constant dense<0.000000e+00> : vector<8x128xf32>
    %3 = tpu.matmul %0, %1, %cst {dimension_numbers = #tpu.dot_dimension_numbers<[1], [0], [0], [1], [0, 0, 1, 1], [], []>} : vector<8x32xf32>, vector<32x128xf32>, vector<8x128xf32> -> vector<8x128xf32>
    %4 = vector.broadcast %2 : vector<1x128xf32> to vector<8x128xf32>
    %5 = arith.addf %3, %4 : vector<8x128xf32>
    %cst_5 = arith.constant 0.000000e+00 : f32
    %6 = vector.broadcast %cst_5 : f32 to vector<8x128xf32>
    %7 = arith.maximumf %5, %6 : vector<8x128xf32>
    %c0_6 = arith.constant 0 : index
    %c0_7 = arith.constant 0 : index
    %8 = vector.load %arg3[%c0_6, %c0_7] : memref<128x128xf32, #tpu.memory_space<vmem>>, vector<128x128xf32>
    %c1 = arith.constant 1 : index
    %c0_8 = arith.constant 0 : index
    %9 = vector.load %arg5[%c1, %c0_8] : memref<3x128xf32, #tpu.memory_space<vmem>>, vector<1x128xf32>
    %cst_9 = arith.constant dense<0.000000e+00> : vector<8x128xf32>
    %10 = tpu.matmul %7, %8, %cst_9 {dimension_numbers = #tpu.dot_dimension_numbers<[1], [0], [0], [1], [0, 0, 1, 1], [], []>} : vector<8x128xf32>, vector<128x128xf32>, vector<8x128xf32> -> vector<8x128xf32>
    %11 = vector.broadcast %9 : vector<1x128xf32> to vector<8x128xf32>
    %12 = arith.addf %10, %11 : vector<8x128xf32>
    %cst_10 = arith.constant 0.000000e+00 : f32
    %13 = vector.broadcast %cst_10 : f32 to vector<8x128xf32>
    %14 = arith.maximumf %12, %13 : vector<8x128xf32>
    %c0_11 = arith.constant 0 : index
    %c0_12 = arith.constant 0 : index
    %15 = vector.load %arg4[%c0_11, %c0_12] : memref<128x128xf32, #tpu.memory_space<vmem>>, vector<128x128xf32>
    %c2 = arith.constant 2 : index
    %c0_13 = arith.constant 0 : index
    %16 = vector.load %arg5[%c2, %c0_13] : memref<3x128xf32, #tpu.memory_space<vmem>>, vector<1x128xf32>
    %cst_14 = arith.constant dense<0.000000e+00> : vector<8x128xf32>
    %17 = tpu.matmul %14, %15, %cst_14 {dimension_numbers = #tpu.dot_dimension_numbers<[1], [0], [0], [1], [0, 0, 1, 1], [], []>} : vector<8x128xf32>, vector<128x128xf32>, vector<8x128xf32> -> vector<8x128xf32>
    %18 = vector.broadcast %16 : vector<1x128xf32> to vector<8x128xf32>
    %19 = arith.addf %17, %18 : vector<8x128xf32>
    %cst_15 = arith.constant dense<0xFF800000> : vector<8xf32>
    %20 = vector.multi_reduction <maximumf>, %19, %cst_15 [1] : vector<8x128xf32> to vector<8xf32>
    %21 = vector.shape_cast %20 : vector<8xf32> to vector<8x1xf32>
    %22 = vector.broadcast %21 : vector<8x1xf32> to vector<8x128xf32>
    %23 = arith.subf %19, %22 : vector<8x128xf32>
    %24 = math.exp %23 : vector<8x128xf32>
    %cst_16 = arith.constant dense<0.000000e+00> : vector<8xf32>
    %25 = vector.multi_reduction <add>, %24, %cst_16 [1] : vector<8x128xf32> to vector<8xf32>
    %26 = vector.shape_cast %25 : vector<8xf32> to vector<8x1xf32>
    %27 = math.log %26 : vector<8x1xf32>
    %28 = arith.addf %21, %27 : vector<8x1xf32>
    %29 = vector.broadcast %28 : vector<8x1xf32> to vector<8x128xf32>
    %30 = arith.subf %19, %29 : vector<8x128xf32>
    %c0_17 = arith.constant 0 : index
    %c0_18 = arith.constant 0 : index
    %31 = vector.load %arg6[%c0_17, %c0_18] : memref<8x128xf32, #tpu.memory_space<vmem>>, vector<8x128xf32>
    tpu.vector_store %arg6[%c0_17, %c0_18], %30 {strides = array<i32>} : memref<8x128xf32, #tpu.memory_space<vmem>>, vector<8x128xf32>,
    return
  }
  func.func @transform_0(%arg0: i32) -> (i32, i32) {
    %c0_i32 = arith.constant 0 : i32
    %c0_i32_0 = arith.constant 0 : i32
    return %arg0, %c0_i32 : i32, i32
  }
  func.func @transform_1(%arg0: i32) -> (i32, i32) {
    %c0_i32 = arith.constant 0 : i32
    %c0_i32_0 = arith.constant 0 : i32
    %c0_i32_1 = arith.constant 0 : i32
    return %c0_i32, %c0_i32_0 : i32, i32
  }
  func.func @transform_2(%arg0: i32) -> (i32, i32) {
    %c0_i32 = arith.constant 0 : i32
    %c0_i32_0 = arith.constant 0 : i32
    %c0_i32_1 = arith.constant 0 : i32
    return %c0_i32, %c0_i32_0 : i32, i32
  }
  func.func @transform_3(%arg0: i32) -> (i32, i32) {
    %c0_i32 = arith.constant 0 : i32
    %c0_i32_0 = arith.constant 0 : i32
    %c0_i32_1 = arith.constant 0 : i32
    return %c0_i32, %c0_i32_0 : i32, i32
  }
  func.func @transform_4(%arg0: i32) -> (i32, i32) {
    %c0_i32 = arith.constant 0 : i32
    %c0_i32_0 = arith.constant 0 : i32
    %c0_i32_1 = arith.constant 0 : i32
    return %c0_i32, %c0_i32_0 : i32, i32
  }
  func.func @transform_5(%arg0: i32) -> (i32, i32) {
    %c0_i32 = arith.constant 0 : i32
    %c0_i32_0 = arith.constant 0 : i32
    return %arg0, %c0_i32 : i32, i32
  }
}

</mosaic_0001>

<llo_original>
// kernel: tpu_custom_call.1
$region0: #{tpu_custom_call.1}
  #allocation0 [shape = 'u32[]', space=smem, size = 0x4, offset = 0x4, fixed_abs, tag = 'smem constant byte address 0x4 - core index']
  #allocation1 [shape = 'u32[144,128]{1,0:T(1,128)}', space=vmem, size = 0x12000, scoped, tag = 'internal scratch']
  %s0 = inlined_call_operand.hbm [shape: f32[8,32], index: 0, kind: input, shape index: {}]
  %s1 = inlined_call_operand.hbm [shape: f32[32,128], index: 1, kind: input, shape index: {}]
  %s2 = inlined_call_operand.hbm [shape: f32[128,128], index: 2, kind: input, shape index: {}]
  %s3 = inlined_call_operand.hbm [shape: f32[128,128], index: 3, kind: input, shape index: {}]
  %s4 = inlined_call_operand.vmem [shape: f32[3,128], index: 4, kind: input, shape index: {}]
  %s5 = inlined_call_operand.hbm [shape: f32[8,128], index: 5, kind: output, shape index: {}]
  %s6 = sld [smem:[#allocation0]]
  $region46: #{tpu_custom_call.1} parent=0
    _
  %s8 = ssub.s32 1, %s6
  %s9 = scalar_select 0, %s8, %s6
  $region1: #{tpu_custom_call.1} parent=0
    #allocation2 [shape = 'u8[4096]{0}', space=vmem, size = 0x1000, scoped, tag = 'input window, operand 0, single buffered']
    #allocation3 [shape = 's32[1]{0}', space=sflag, size = 0x4, scoped, tag = 'scoped memory for tpu_custom_call.1']
    #allocation4 [shape = 's32[1]{0}', space=sflag, size = 0x4, scoped, tag = 'scoped memory for tpu_custom_call.1']
    #allocation5 [shape = 'u8[16384]{0}', space=vmem, size = 0x4000, scoped, tag = 'input window, operand 1, single buffered']
    #allocation6 [shape = 's32[1]{0}', space=sflag, size = 0x4, scoped, tag = 'scoped memory for tpu_custom_call.1']
    #allocation7 [shape = 'u8[65536]{0}', space=vmem, size = 0x10000, scoped, tag = 'input window, operand 2, single buffered']
    #allocation8 [shape = 'u8[65536]{0}', space=vmem, size = 0x10000, scoped, tag = 'input window, operand 3, single buffered']
    #allocation9 [shape = 's32[1]{0}', space=sflag, size = 0x4, scoped, tag = 'scoped memory for tpu_custom_call.1']
    #allocation10 [shape = 'u8[4096]{0}', space=vmem, size = 0x1000, scoped, tag = 'output window, operand 0, single buffered']
    %10 = vsyncpa [#allocation3], 0
    %11 = vsyncpa [#allocation6], 0
    %12 = vsyncpa [#allocation9], 0
    %13 = vsyncpa [#allocation4], 0
    // Predicated region
    $region2: #{tpu_custom_call.1} parent=1 // pred_check
      _
    $region3: #{tpu_custom_call.1} parent=1 // pred_check_branch
      %15 = sbr.rel (0) target = $region5
    $region4: #{tpu_custom_call.1} parent=1 // pred_region
      %s17 = ssub.s32 128, 128
      %18 = vsyncadd [#allocation3], %s17
      %s20 = sshll.u32 [#allocation2], 4
      %s21 = int_to_ptr.vmem [resolvable:$true] %s20
      %23 = dma.hbm_to_vmem [thread:$0]  %s0, 128, %s21, [#allocation3]
    $region5: #{tpu_custom_call.1} parent=1 // pred_fallthru
      _
    // Predicated region
    $region6: #{tpu_custom_call.1} parent=1 // pred_check
      _
    $region7: #{tpu_custom_call.1} parent=1 // pred_check_branch
      %25 = sbr.rel (0) target = $region9
    $region8: #{tpu_custom_call.1} parent=1 // pred_region
      %s27 = ssub.s32 512, 512
      %28 = vsyncadd [#allocation6], %s27
      %s29 = sshll.u32 [#allocation5], 4
      %s30 = int_to_ptr.vmem [resolvable:$true] %s29
      %35 = dma.hbm_to_vmem [thread:$0]  %s1, 512, %s30, [#allocation6], 128, 128, 8
    $region9: #{tpu_custom_call.1} parent=1 // pred_fallthru
      _
    // Predicated region
    $region10: #{tpu_custom_call.1} parent=1 // pred_check
      _
    $region11: #{tpu_custom_call.1} parent=1 // pred_check_branch
      %37 = sbr.rel (0) target = $region13
    $region12: #{tpu_custom_call.1} parent=1 // pred_region
      %s39 = ssub.s32 2048, 2048
      %40 = vsyncadd [#allocation6], %s39
      %s41 = sshll.u32 [#allocation7], 4
      %s42 = int_to_ptr.vmem [resolvable:$true] %s41
      %47 = dma.hbm_to_vmem [thread:$0]  %s2, 2048, %s42, [#allocation6], 128, 128, 8
    $region13: #{tpu_custom_call.1} parent=1 // pred_fallthru
      _
    // Predicated region
    $region14: #{tpu_custom_call.1} parent=1 // pred_check
      _
    $region15: #{tpu_custom_call.1} parent=1 // pred_check_branch
      %49 = sbr.rel (0) target = $region17
    $region16: #{tpu_custom_call.1} parent=1 // pred_region
      %s51 = ssub.s32 2048, 2048
      %52 = vsyncadd [#allocation9], %s51
      %s53 = sshll.u32 [#allocation8], 4
      %s54 = int_to_ptr.vmem [resolvable:$true] %s53
      %59 = dma.hbm_to_vmem [thread:$0]  %s3, 2048, %s54, [#allocation9], 128, 128, 8
    $region17: #{tpu_custom_call.1} parent=1 // pred_fallthru
      _
    // Predicated region
    $region18: #{tpu_custom_call.1} parent=1 // pred_check
      _
    $region19: #{tpu_custom_call.1} parent=1 // pred_check_branch
      %61 = sbr.rel (0) target = $region21
    $region20: #{tpu_custom_call.1} parent=1 // pred_region
      _
    $region21: #{tpu_custom_call.1} parent=1 // pred_fallthru
      _
    // Predicated region
    $region22: #{tpu_custom_call.1} parent=1 // pred_check
      _
    $region23: #{tpu_custom_call.1} parent=1 // pred_check_branch
      %63 = sbr.rel (0) target = $region25
    $region24: #{tpu_custom_call.1} parent=1 // pred_region
      %64 = dma.done [#allocation3], 128
    $region25: #{tpu_custom_call.1} parent=1 // pred_fallthru
      _
    // Predicated region
    $region26: #{tpu_custom_call.1} parent=1 // pred_check
      _
    $region27: #{tpu_custom_call.1} parent=1 // pred_check_branch
      %66 = sbr.rel (0) target = $region29
    $region28: #{tpu_custom_call.1} parent=1 // pred_region
      %67 = dma.done [#allocation6], 512
    $region29: #{tpu_custom_call.1} parent=1 // pred_fallthru
      _
    // Predicated region
    $region30: #{tpu_custom_call.1} parent=1 // pred_check
      _
    $region31: #{tpu_custom_call.1} parent=1 // pred_check_branch
      %69 = sbr.rel (0) target = $region33
    $region32: #{tpu_custom_call.1} parent=1 // pred_region
      %70 = dma.done [#allocation6], 2048
    $region33: #{tpu_custom_call.1} parent=1 // pred_fallthru
      _
    // Predicated region
    $region34: #{tpu_custom_call.1} parent=1 // pred_check
      _
    $region35: #{tpu_custom_call.1} parent=1 // pred_check_branch
      %72 = sbr.rel (0) target = $region37
    $region36: #{tpu_custom_call.1} parent=1 // pred_region
      %73 = dma.done [#allocation9], 2048
    $region37: #{tpu_custom_call.1} parent=1 // pred_fallthru
      _
    %v74 = vld [vmem:[#allocation2] sm:$0xff]
    %v75 = vld [vmem:[#allocation5] sm:$0xff]
    %v76 = vld [vmem:[#allocation5 + $0x8] sm:$0xff]
    %v77 = vld [vmem:[#allocation5 + $0x10] sm:$0xff]
    %v78 = vld [vmem:[#allocation5 + $0x18] sm:$0xff]
    %v79 = vld [vmem:[%s4] sm:$0x1]
    %v80 = vlaneseq
    %v81 = vshrl.u32 %v80, 7
    %v82 = vsub.s32 0, %v81
    %v83 = vrot.slane %v79, %v82
    %vm84 = vcmask 261120
    %v86 = vsel %vm84, %v74, 0
    %88 = vmatprep.subr.mxu0 0.0
    %89 = vmatpush1.msra.mxu0 0.0
    %90 = vmatprep.subr.mxu0 0.0
    %91 = vmatpush1.msra.mxu0 0.0
    %92 = vmatprep.subr.mxu0 0.0
    %93 = vmatpush1.msra.mxu0 0.0
    %94 = vmatprep.subr.mxu0 0.0
    %95 = vmatpush1.msra.mxu0 0.0
    %96 = vmatprep.subr.mxu0 0.0
    %97 = vmatpush1.msra.mxu0 0.0
    %98 = vmatprep.subr.mxu0 0.0
    %99 = vmatpush1.msra.mxu0 0.0
    %100 = vmatprep.subr.mxu0 0.0
    %101 = vmatpush1.msra.mxu0 0.0
    %102 = vmatprep.subr.mxu0 0.0
    %103 = vmatpush1.msra.mxu0 0.0
    %104 = vmatprep.subr.mxu0 0.0
    %105 = vmatpush1.msra.mxu0 0.0
    %106 = vmatprep.subr.mxu0 0.0
    %107 = vmatpush1.msra.mxu0 0.0
    %108 = vmatprep.subr.mxu0 0.0
    %109 = vmatpush1.msra.mxu0 0.0
    %110 = vmatprep.subr.mxu0 0.0
    %111 = vmatpush1.msra.mxu0 0.0
    %112 = vmatprep.subr.mxu0 0.0
    %113 = vmatpush1.msra.mxu0 %v78
    %114 = vmatprep.subr.mxu0 0.0
    %115 = vmatpush1.msra.mxu0 %v77
    %116 = vmatprep.subr.mxu0 0.0
    %117 = vmatpush1.msra.mxu0 %v76
    %118 = vmatprep.subr.mxu0 0.0
    %119 = vmatpush1.msra.mxu0 %v75
    %120 = vmatprep.subr.mxu0 0.0
    %121 = vmatpush2.msra.mxu0 0.0
    %122 = vmatprep.subr.mxu0 0.0
    %123 = vmatpush2.msra.mxu0 0.0
    %124 = vmatprep.subr.mxu0 0.0
    %125 = vmatpush2.msra.mxu0 0.0
    %126 = vmatprep.subr.mxu0 0.0
    %127 = vmatpush2.msra.mxu0 0.0
    %128 = vmatprep.subr.mxu0 0.0
    %129 = vmatpush2.msra.mxu0 0.0
    %130 = vmatprep.subr.mxu0 0.0
    %131 = vmatpush2.msra.mxu0 0.0
    %132 = vmatprep.subr.mxu0 0.0
    %133 = vmatpush2.msra.mxu0 0.0
    %134 = vmatprep.subr.mxu0 0.0
    %135 = vmatpush2.msra.mxu0 0.0
    %136 = vmatprep.subr.mxu0 0.0
    %137 = vmatpush2.msra.mxu0 0.0
    %138 = vmatprep.subr.mxu0 0.0
    %139 = vmatpush2.msra.mxu0 0.0
    %140 = vmatprep.subr.mxu0 0.0
    %141 = vmatpush2.msra.mxu0 0.0
    %142 = vmatprep.subr.mxu0 0.0
    %143 = vmatpush2.msra.mxu0 0.0
    %144 = vmatprep.subr.mxu0 0.0
    %145 = vmatpush2.msra.mxu0 0.0
    %146 = vmatprep.subr.mxu0 0.0
    %147 = vmatpush2.msra.mxu0 0.0
    %148 = vmatprep.subr.mxu0 0.0
    %149 = vmatpush2.msra.mxu0 0.0
    %150 = vmatprep.subr.mxu0 0.0
    %151 = vmatpush2.msra.mxu0 0.0
    %152 = vmatprep.mubr.f32.mxu0 0.0
    %153 = vmatmul.mubr.f32.gmra.mxu0 %v86
    %v154 = vpop.f32.mrf.mxu0
    %v155 = vadd.f32 %v83, %v154
    %v156 = vpop.f32.mrf.mxu0
    %157 = vdwg.mxu0
    %v158 = vmax.f32 %v155, 0.0
    %v159 = vld [vmem:[#allocation7] sm:$0xff]
    %v160 = vld [vmem:[#allocation7 + $0x8] sm:$0xff]
    %v161 = vld [vmem:[#allocation7 + $0x10] sm:$0xff]
    %v162 = vld [vmem:[#allocation7 + $0x18] sm:$0xff]
    %v163 = vld [vmem:[#allocation7 + $0x20] sm:$0xff]
    %v164 = vld [vmem:[#allocation7 + $0x28] sm:$0xff]
    %v165 = vld [vmem:[#allocation7 + $0x30] sm:$0xff]
    %v166 = vld [vmem:[#allocation7 + $0x38] sm:$0xff]
    %v167 = vld [vmem:[#allocation7 + $0x40] sm:$0xff]
    %v168 = vld [vmem:[#allocation7 + $0x48] sm:$0xff]
    %v169 = vld [vmem:[#allocation7 + $0x50] sm:$0xff]
    %v170 = vld [vmem:[#allocation7 + $0x58] sm:$0xff]
    %v171 = vld [vmem:[#allocation7 + $0x60] sm:$0xff]
    %v172 = vld [vmem:[#allocation7 + $0x68] sm:$0xff]
    %v173 = vld [vmem:[#allocation7 + $0x70] sm:$0xff]
    %v174 = vld [vmem:[#allocation7 + $0x78] sm:$0xff]
    %v175 = vld [vmem:[%s4 + $0x1] sm:$0x1]
    %v176 = vlaneseq
    %v177 = vshrl.u32 %v176, 7
    %v178 = vsub.s32 0, %v177
    %v179 = vrot.slane %v175, %v178
    %180 = vmatprep.subr.mxu0 0.0
    %181 = vmatpush1.msra.mxu0 %v174
    %182 = vmatprep.subr.mxu0 0.0
    %183 = vmatpush1.msra.mxu0 %v173
    %184 = vmatprep.subr.mxu0 0.0
    %185 = vmatpush1.msra.mxu0 %v172
    %186 = vmatprep.subr.mxu0 0.0
    %187 = vmatpush1.msra.mxu0 %v171
    %188 = vmatprep.subr.mxu0 0.0
    %189 = vmatpush1.msra.mxu0 %v170
    %190 = vmatprep.subr.mxu0 0.0
    %191 = vmatpush1.msra.mxu0 %v169
    %192 = vmatprep.subr.mxu0 0.0
    %193 = vmatpush1.msra.mxu0 %v168
    %194 = vmatprep.subr.mxu0 0.0
    %195 = vmatpush1.msra.mxu0 %v167
    %196 = vmatprep.subr.mxu0 0.0
    %197 = vmatpush1.msra.mxu0 %v166
    %198 = vmatprep.subr.mxu0 0.0
    %199 = vmatpush1.msra.mxu0 %v165
    %200 = vmatprep.subr.mxu0 0.0
    %201 = vmatpush1.msra.mxu0 %v164
    %202 = vmatprep.subr.mxu0 0.0
    %203 = vmatpush1.msra.mxu0 %v163
    %204 = vmatprep.subr.mxu0 0.0
    %205 = vmatpush1.msra.mxu0 %v162
    %206 = vmatprep.subr.mxu0 0.0
    %207 = vmatpush1.msra.mxu0 %v161
    %208 = vmatprep.subr.mxu0 0.0
    %209 = vmatpush1.msra.mxu0 %v160
    %210 = vmatprep.subr.mxu0 0.0
    %211 = vmatpush1.msra.mxu0 %v159
    %212 = vmatprep.subr.mxu0 0.0
    %213 = vmatpush2.msra.mxu0 0.0
    %214 = vmatprep.subr.mxu0 0.0
    %215 = vmatpush2.msra.mxu0 0.0
    %216 = vmatprep.subr.mxu0 0.0
    %217 = vmatpush2.msra.mxu0 0.0
    %218 = vmatprep.subr.mxu0 0.0
    %219 = vmatpush2.msra.mxu0 0.0
    %220 = vmatprep.subr.mxu0 0.0
    %221 = vmatpush2.msra.mxu0 0.0
    %222 = vmatprep.subr.mxu0 0.0
    %223 = vmatpush2.msra.mxu0 0.0
    %224 = vmatprep.subr.mxu0 0.0
    %225 = vmatpush2.msra.mxu0 0.0
    %226 = vmatprep.subr.mxu0 0.0
    %227 = vmatpush2.msra.mxu0 0.0
    %228 = vmatprep.subr.mxu0 0.0
    %229 = vmatpush2.msra.mxu0 0.0
    %230 = vmatprep.subr.mxu0 0.0
    %231 = vmatpush2.msra.mxu0 0.0
    %232 = vmatprep.subr.mxu0 0.0
    %233 = vmatpush2.msra.mxu0 0.0
    %234 = vmatprep.subr.mxu0 0.0
    %235 = vmatpush2.msra.mxu0 0.0
    %236 = vmatprep.subr.mxu0 0.0
    %237 = vmatpush2.msra.mxu0 0.0
    %238 = vmatprep.subr.mxu0 0.0
    %239 = vmatpush2.msra.mxu0 0.0
    %240 = vmatprep.subr.mxu0 0.0
    %241 = vmatpush2.msra.mxu0 0.0
    %242 = vmatprep.subr.mxu0 0.0
    %243 = vmatpush2.msra.mxu0 0.0
    %244 = vmatprep.mubr.f32.mxu0 0.0
    %245 = vmatmul.mubr.f32.gmra.mxu0 %v158
    %v246 = vpop.f32.mrf.mxu0
    %v247 = vadd.f32 %v179, %v246
    %v248 = vpop.f32.mrf.mxu0
    %249 = vdwg.mxu0
    %v250 = vmax.f32 %v247, 0.0
    %v251 = vld [vmem:[#allocation8] sm:$0xff]
    %v252 = vld [vmem:[#allocation8 + $0x8] sm:$0xff]
    %v253 = vld [vmem:[#allocation8 + $0x10] sm:$0xff]
    %v254 = vld [vmem:[#allocation8 + $0x18] sm:$0xff]
    %v255 = vld [vmem:[#allocation8 + $0x20] sm:$0xff]
    %v256 = vld [vmem:[#allocation8 + $0x28] sm:$0xff]
    %v257 = vld [vmem:[#allocation8 + $0x30] sm:$0xff]
    %v258 = vld [vmem:[#allocation8 + $0x38] sm:$0xff]
    %v259 = vld [vmem:[#allocation8 + $0x40] sm:$0xff]
    %v260 = vld [vmem:[#allocation8 + $0x48] sm:$0xff]
    %v261 = vld [vmem:[#allocation8 + $0x50] sm:$0xff]
    %v262 = vld [vmem:[#allocation8 + $0x58] sm:$0xff]
    %v263 = vld [vmem:[#allocation8 + $0x60] sm:$0xff]
    %v264 = vld [vmem:[#allocation8 + $0x68] sm:$0xff]
    %v265 = vld [vmem:[#allocation8 + $0x70] sm:$0xff]
    %v266 = vld [vmem:[#allocation8 + $0x78] sm:$0xff]
    %v267 = vld [vmem:[%s4 + $0x2] sm:$0x1]
    %v268 = vlaneseq
    %v269 = vshrl.u32 %v268, 7
    %v270 = vsub.s32 0, %v269
    %v271 = vrot.slane %v267, %v270
    %272 = vmatprep.subr.mxu0 0.0
    %273 = vmatpush1.msra.mxu0 %v266
    %274 = vmatprep.subr.mxu0 0.0
    %275 = vmatpush1.msra.mxu0 %v265
    %276 = vmatprep.subr.mxu0 0.0
    %277 = vmatpush1.msra.mxu0 %v264
    %278 = vmatprep.subr.mxu0 0.0
    %279 = vmatpush1.msra.mxu0 %v263
    %280 = vmatprep.subr.mxu0 0.0
    %281 = vmatpush1.msra.mxu0 %v262
    %282 = vmatprep.subr.mxu0 0.0
    %283 = vmatpush1.msra.mxu0 %v261
    %284 = vmatprep.subr.mxu0 0.0
    %285 = vmatpush1.msra.mxu0 %v260
    %286 = vmatprep.subr.mxu0 0.0
    %287 = vmatpush1.msra.mxu0 %v259
    %288 = vmatprep.subr.mxu0 0.0
    %289 = vmatpush1.msra.mxu0 %v258
    %290 = vmatprep.subr.mxu0 0.0
    %291 = vmatpush1.msra.mxu0 %v257
    %292 = vmatprep.subr.mxu0 0.0
    %293 = vmatpush1.msra.mxu0 %v256
    %294 = vmatprep.subr.mxu0 0.0
    %295 = vmatpush1.msra.mxu0 %v255
    %296 = vmatprep.subr.mxu0 0.0
    %297 = vmatpush1.msra.mxu0 %v254
    %298 = vmatprep.subr.mxu0 0.0
    %299 = vmatpush1.msra.mxu0 %v253
    %300 = vmatprep.subr.mxu0 0.0
    %301 = vmatpush1.msra.mxu0 %v252
    %302 = vmatprep.subr.mxu0 0.0
    %303 = vmatpush1.msra.mxu0 %v251
    %304 = vmatprep.subr.mxu0 0.0
    %305 = vmatpush2.msra.mxu0 0.0
    %306 = vmatprep.subr.mxu0 0.0
    %307 = vmatpush2.msra.mxu0 0.0
    %308 = vmatprep.subr.mxu0 0.0
    %309 = vmatpush2.msra.mxu0 0.0
    %310 = vmatprep.subr.mxu0 0.0
    %311 = vmatpush2.msra.mxu0 0.0
    %312 = vmatprep.subr.mxu0 0.0
    %313 = vmatpush2.msra.mxu0 0.0
    %314 = vmatprep.subr.mxu0 0.0
    %315 = vmatpush2.msra.mxu0 0.0
    %316 = vmatprep.subr.mxu0 0.0
    %317 = vmatpush2.msra.mxu0 0.0
    %318 = vmatprep.subr.mxu0 0.0
    %319 = vmatpush2.msra.mxu0 0.0
    %320 = vmatprep.subr.mxu0 0.0
    %321 = vmatpush2.msra.mxu0 0.0
    %322 = vmatprep.subr.mxu0 0.0
    %323 = vmatpush2.msra.mxu0 0.0
    %324 = vmatprep.subr.mxu0 0.0
    %325 = vmatpush2.msra.mxu0 0.0
    %326 = vmatprep.subr.mxu0 0.0
    %327 = vmatpush2.msra.mxu0 0.0
    %328 = vmatprep.subr.mxu0 0.0
    %329 = vmatpush2.msra.mxu0 0.0
    %330 = vmatprep.subr.mxu0 0.0
    %331 = vmatpush2.msra.mxu0 0.0
    %332 = vmatprep.subr.mxu0 0.0
    %333 = vmatpush2.msra.mxu0 0.0
    %334 = vmatprep.subr.mxu0 0.0
    %335 = vmatpush2.msra.mxu0 0.0
    %336 = vmatprep.mubr.f32.mxu0 0.0
    %337 = vmatmul.mubr.f32.gmra.mxu0 %v250
    %v338 = vpop.f32.mrf.mxu0
    %v339 = vadd.f32 %v271, %v338
    %v340 = vpop.f32.mrf.mxu0
    %341 = vdwg.mxu0
    %342 = vmax.xlane.f32.xlu0 %v339
    %v343 = vpop.xlane.xlu0 %342
    %v344 = vsub.f32 %v339, %v343
    %v345 = vmul.f32 %v344, 1.442695
    %v346 = vpow.pop %v345
    %347 = vadd.xlane.f32.xlu0 %v346
    %v348 = vpop.xlane.xlu0 %347
    %v349 = vlog2.pop %v348
    %v350 = vmul.f32 %v349, 0.6931472
    %v351 = vadd.f32 %v343, %v350
    %v352 = vsub.f32 %v339, %v351
    %353 = vst [vmem:[#allocation10] sm:$0xff] %v352
    // Predicated region
    $region38: #{tpu_custom_call.1} parent=1 // pred_check
      _
    $region39: #{tpu_custom_call.1} parent=1 // pred_check_branch
      %355 = sbr.rel (0) target = $region41
    $region40: #{tpu_custom_call.1} parent=1 // pred_region
      %s357 = ssub.s32 128, 128
      %358 = vsyncadd [#allocation4], %s357
      %s360 = sshll.u32 [#allocation10], 4
      %s361 = int_to_ptr.vmem [resolvable:$true] %s360
      %363 = dma.vmem_to_hbm [thread:$0]  %s361, 128, %s5, [#allocation4]
    $region41: #{tpu_custom_call.1} parent=1 // pred_fallthru
      _
    // Predicated region
    $region42: #{tpu_custom_call.1} parent=1 // pred_check
      _
    $region43: #{tpu_custom_call.1} parent=1 // pred_check_branch
      %365 = sbr.rel (0) target = $region45
    $region44: #{tpu_custom_call.1} parent=1 // pred_region
      %366 = dma.done [#allocation4], 128
    $region45: #{tpu_custom_call.1} parent=1 // pred_fallthru
      _
    %367 = vsyncpa [#allocation3], 1
    %368 = vsyncpa [#allocation6], 1
    %369 = vsyncpa [#allocation9], 1
    %370 = vsyncpa [#allocation4], 1

</llo_original>
